<compile_context>
chip_gen: v6e
topology: v6e:2x2x1
jax: 0.10.0
libtpu: 0.0.40
codegen_flags: <defaults>
</compile_context>

<pallas_src>
import math
from functools import partial

import jax
import jax.numpy as jnp
from jax.experimental import pallas as pl
from jax.experimental.pallas import tpu as pltpu


# ----------------------------------------------------------------------------
# Helpers
# ----------------------------------------------------------------------------
def _round_up(x, m):
    return (x + m - 1) // m * m


def _vmem_budget():
    """Generation-aware VMEM budget: ~75% of per-core capacity."""
    try:
        cap = int(pltpu.get_tpu_info().vmem_capacity_bytes)
    except Exception:                    # conservative fallback (v7x-sized)
        cap = 64 * 1024 * 1024
    return max(32 * 1024 * 1024, cap * 3 // 4)


def _reduction_tile(d, target=512):
    """Tile for a contraction axis: must divide d evenly AND be a multiple of
    128 (lane constraint) — otherwise keep the whole axis in one block."""
    if d <= target:
        return d
    for t in (512, 384, 256, 128):
        if d % t == 0:
            return t
    return d


# ----------------------------------------------------------------------------
# Fused Q/K/V projection.  Weights are passed pre-transposed as (d_in, d_out).
# The 1/sqrt(d_k) attention scale is folded into the Q output (epilogue only).
# ----------------------------------------------------------------------------
def _qkv_kernel_resident(q_ref, k_ref, v_ref, wq_ref, wk_ref, wv_ref,
                         bq_ref, bk_ref, bv_ref, oq_ref, ok_ref, ov_ref,
                         *, q_scale):
    # Weights resident in VMEM (constant index_map): pure streaming matmul,
    # no accumulator scratch, no K grid axis.
    oq_ref[...] = (jnp.dot(q_ref[...], wq_ref[...],
                           preferred_element_type=jnp.float32)
                   + bq_ref[...]) * q_scale
    ok_ref[...] = jnp.dot(k_ref[...], wk_ref[...],
                          preferred_element_type=jnp.float32) + bk_ref[...]
    ov_ref[...] = jnp.dot(v_ref[...], wv_ref[...],
                          preferred_element_type=jnp.float32) + bv_ref[...]


def _qkv_kernel_tiled(q_ref, k_ref, v_ref, wq_ref, wk_ref, wv_ref,
                      bq_ref, bk_ref, bv_ref, oq_ref, ok_ref, ov_ref,
                      accq, acck, accv, *, q_scale):
    @pl.when(pl.program_id(2) == 0)
    def _():
        accq[...] = jnp.zeros_like(accq)
        acck[...] = jnp.zeros_like(acck)
        accv[...] = jnp.zeros_like(accv)

    accq[...] += jnp.dot(q_ref[...], wq_ref[...], preferred_element_type=jnp.float32)
    acck[...] += jnp.dot(k_ref[...], wk_ref[...], preferred_element_type=jnp.float32)
    accv[...] += jnp.dot(v_ref[...], wv_ref[...], preferred_element_type=jnp.float32)

    @pl.when(pl.program_id(2) == pl.num_programs(2) - 1)
    def _():
        oq_ref[...] = (accq[...] + bq_ref[...]) * q_scale
        ok_ref[...] = acck[...] + bk_ref[...]
        ov_ref[...] = accv[...] + bv_ref[...]


def pallas_qkv_proj(q2d, k2d, v2d, wq_t, wk_t, wv_t, bq, bk, bv,
                    *, q_scale, budget):
    rows, d_in = q2d.shape
    d_out = wq_t.shape[1]
    row_target = 512 if budget >= 96 * 1024 * 1024 else 256
    rt = min(row_target, _round_up(rows, 8))

    w_bytes = 2 * 3 * d_in * d_out * 4                      # ×2: buffering slack
    def act_bytes(r):
        return 2 * 3 * r * (d_in + d_out) * 4
    while rt > 8 and w_bytes + act_bytes(rt) > budget:
        rt = max(8, rt // 2)

    out_sd = jax.ShapeDtypeStruct((rows, d_out), jnp.float32)
    bq2, bk2, bv2 = (b.reshape(1, d_out) for b in (bq, bk, bv))

    if w_bytes + act_bytes(rt) <= budget:
        # --- resident-weight path: grid over row tiles only ------------------
        x_spec = pl.BlockSpec((rt, d_in), lambda i: (i, 0))
        w_spec = pl.BlockSpec((d_in, d_out), lambda i: (0, 0))
        b_spec = pl.BlockSpec((1, d_out), lambda i: (0, 0))
        o_spec = pl.BlockSpec((rt, d_out), lambda i: (i, 0))
        return pl.pallas_call(
            partial(_qkv_kernel_resident, q_scale=q_scale),
            out_shape=(out_sd, out_sd, out_sd),
            grid=(pl.cdiv(rows, rt),),
            in_specs=[x_spec, x_spec, x_spec,
                      w_spec, w_spec, w_spec,
                      b_spec, b_spec, b_spec],
            out_specs=(o_spec, o_spec, o_spec),
            compiler_params=pltpu.CompilerParams(
                dimension_semantics=("parallel",),
                vmem_limit_bytes=budget),
        )(q2d, k2d, v2d, wq_t, wk_t, wv_t, bq2, bk2, bv2)

    # --- fallback for very large d_model: tile N and the K reduction ---------
    kt = _reduction_tile(d_in)
    nt = d_out if d_out <= 512 else 512
    x_spec = pl.BlockSpec((rt, kt), lambda i, j, kk: (i, kk))
    w_spec = pl.BlockSpec((kt, nt), lambda i, j, kk: (kk, j))
    b_spec = pl.BlockSpec((1, nt), lambda i, j, kk: (0, j))
    o_spec = pl.BlockSpec((rt, nt), lambda i, j, kk: (i, j))
    return pl.pallas_call(
        partial(_qkv_kernel_tiled, q_scale=q_scale),
        out_shape=(out_sd, out_sd, out_sd),
        grid=(pl.cdiv(rows, rt), pl.cdiv(d_out, nt), d_in // kt),
        in_specs=[x_spec, x_spec, x_spec,
                  w_spec, w_spec, w_spec,
                  b_spec, b_spec, b_spec],
        out_specs=(o_spec, o_spec, o_spec),
        scratch_shapes=[pltpu.VMEM((rt, nt), jnp.float32)] * 3,
        compiler_params=pltpu.CompilerParams(
            dimension_semantics=("parallel", "parallel", "arbitrary"),
            vmem_limit_bytes=budget),
    )(q2d, k2d, v2d, wq_t, wk_t, wv_t, bq2, bk2, bv2)


# ----------------------------------------------------------------------------
# Single linear (used only when the output projection is NOT fused into the
# attention kernel):  y = x @ W^T + b, with W passed as (d_in, d_out).
# ----------------------------------------------------------------------------
def _linear_kernel_resident(x_ref, w_ref, b_ref, o_ref):
    o_ref[...] = jnp.dot(x_ref[...], w_ref[...],
                         preferred_element_type=jnp.float32) + b_ref[...]


def _linear_kernel_tiled(x_ref, w_ref, b_ref, o_ref, acc_ref):
    @pl.when(pl.program_id(2) == 0)
    def _():
        acc_ref[...] = jnp.zeros_like(acc_ref)

    acc_ref[...] += jnp.dot(x_ref[...], w_ref[...], preferred_element_type=jnp.float32)

    @pl.when(pl.program_id(2) == pl.num_programs(2) - 1)
    def _():
        o_ref[...] = acc_ref[...] + b_ref[...]


def pallas_linear(x2d, w_t, b, *, budget):
    rows, d_in = x2d.shape
    d_out = w_t.shape[1]
    row_target = 512 if budget >= 96 * 1024 * 1024 else 256
    rt = min(row_target, _round_up(rows, 8))

    w_bytes = 2 * d_in * d_out * 4
    def act_bytes(r):
        return 2 * r * (d_in + d_out) * 4
    while rt > 8 and w_bytes + act_bytes(rt) > budget:
        rt = max(8, rt // 2)

    out_sd = jax.ShapeDtypeStruct((rows, d_out), jnp.float32)
    b2 = b.reshape(1, d_out)

    if w_bytes + act_bytes(rt) <= budget:
        return pl.pallas_call(
            _linear_kernel_resident,
            out_shape=out_sd,
            grid=(pl.cdiv(rows, rt),),
            in_specs=[pl.BlockSpec((rt, d_in), lambda i: (i, 0)),
                      pl.BlockSpec((d_in, d_out), lambda i: (0, 0)),
                      pl.BlockSpec((1, d_out), lambda i: (0, 0))],
            out_specs=pl.BlockSpec((rt, d_out), lambda i: (i, 0)),
            compiler_params=pltpu.CompilerParams(
                dimension_semantics=("parallel",),
                vmem_limit_bytes=budget),
        )(x2d, w_t, b2)

    kt = _reduction_tile(d_in)
    nt = d_out if d_out <= 512 else 512
    return pl.pallas_call(
        _linear_kernel_tiled,
        out_shape=out_sd,
        grid=(pl.cdiv(rows, rt), pl.cdiv(d_out, nt), d_in // kt),
        in_specs=[pl.BlockSpec((rt, kt), lambda i, j, kk: (i, kk)),
                  pl.BlockSpec((kt, nt), lambda i, j, kk: (kk, j)),
                  pl.BlockSpec((1, nt), lambda i, j, kk: (0, j))],
        out_specs=pl.BlockSpec((rt, nt), lambda i, j, kk: (i, j)),
        scratch_shapes=[pltpu.VMEM((rt, nt), jnp.float32)],
        compiler_params=pltpu.CompilerParams(
            dimension_semantics=("parallel", "parallel", "arbitrary"),
            vmem_limit_bytes=budget),
    )(x2d, w_t, b2)


# ----------------------------------------------------------------------------
# Attention: grid = (batch, q-tile, kv-tile); online softmax over kv tiles;
# per-head accumulation into a VMEM slab in packed (concat) layout; optional
# fused output projection in the epilogue.
# q arrives pre-scaled by 1/sqrt(d_k).
# ----------------------------------------------------------------------------
def _attn_kernel(*refs, heads, d_k, s_len, kv_tile, kv_pad, masked, fuse):
    i = 0
    q_ref, k_ref, v_ref = refs[0], refs[1], refs[2]
    i = 3
    if masked:
        m_ref = refs[i]; i += 1
    if fuse:
        wo_ref, bo_ref = refs[i], refs[i + 1]; i += 2
    o_ref = refs[i]; i += 1
    acc_ref = refs[i]; i += 1
    if masked:
        m_sc, l_sc = refs[i], refs[i + 1]

    kv = pl.program_id(2)

    @pl.when(kv == 0)
    def _():
        acc_ref[...] = jnp.zeros_like(acc_ref)
        if masked:
            m_sc[...] = jnp.full(m_sc.shape, -jnp.inf, m_sc.dtype)
            l_sc[...] = jnp.zeros_like(l_sc)

    q = q_ref[...]                       # (Tq, d_model), already scaled
    k = k_ref[...]                       # (Tk, d_model)
    v = v_ref[...]                       # (Tk, d_model)

    if kv_pad:                           # partial last KV tile: mask pad cols
        base = kv * kv_tile
        col_ids = jax.lax.broadcasted_iota(jnp.int32, (1, kv_tile), 1) + base
        col_valid = col_ids < s_len                      # (1, Tk)
        row_ids = jax.lax.broadcasted_iota(jnp.int32, (kv_tile, 1), 0) + base
        v = jnp.where(row_ids < s_len, v, jnp.float32(0.0))

    if masked:
        mask_zero = m_ref[...] == 0                      # (Tq, Tk)

    for hh in range(heads):              # static unrolled loop over heads
        lo = hh * d_k
        qh = q[:, lo:lo + d_k]
        kh = k[:, lo:lo + d_k]
        vh = v[:, lo:lo + d_k]
        s = jax.lax.dot_general(qh, kh, (((1,), (1,)), ((), ())),
                                preferred_element_type=jnp.float32)  # (Tq, Tk)
        if masked:
            s = jnp.where(mask_zero, jnp.float32(-1e9), s)   # masked_fill
            if kv_pad:
                # pad columns contribute exactly nothing to the softmax
                s = jnp.where(col_valid, s, jnp.float32(-jnp.inf))
            m_prev = m_sc[:, hh:hh + 1]                      # (Tq, 1)
            m_cur = jnp.maximum(m_prev, jnp.max(s, axis=-1, keepdims=True))
            alpha = jnp.exp(m_prev - m_cur)
            p = jnp.exp(s - m_cur)
            l_sc[:, hh:hh + 1] = alpha * l_sc[:, hh:hh + 1] + \
                jnp.sum(p, axis=-1, keepdims=True)
            acc_ref[:, lo:lo + d_k] = alpha * acc_ref[:, lo:lo + d_k] + \
                jnp.dot(p, vh, preferred_element_type=jnp.float32)
            m_sc[:, hh:hh + 1] = m_cur
        else:
            # NOTE: reference applies NO softmax when mask is None.
            if kv_pad:
                s = jnp.where(col_valid, s, jnp.float32(0.0))
            acc_ref[:, lo:lo + d_k] = acc_ref[:, lo:lo + d_k] + \
                jnp.dot(s, vh, preferred_element_type=jnp.float32)

    @pl.when(kv == pl.num_programs(2) - 1)
    def _():
        if masked:
            # exact reciprocal to preserve 1e-4 parity with the reference
            inv = pl.reciprocal(l_sc[...], approx=False)     # (Tq, heads)
            for hh in range(heads):
                lo = hh * d_k
                acc_ref[:, lo:lo + d_k] = acc_ref[:, lo:lo + d_k] * inv[:, hh:hh + 1]
        concat = acc_ref[...]                                # (Tq, d_model)
        if fuse:
            # fused output projection: one lane-dense store of the final slab
            o_ref[...] = jnp.dot(concat, wo_ref[...],
                                 preferred_element_type=jnp.float32) + bo_ref[...]
        else:
            o_ref[...] = concat


def _attn_plan(S, d_model, budget, masked):
    q_tile = min(256, _round_up(S, 32))
    kv_tile = S if S <= 512 else 512

    def est(qt, kt, fuse):
        b = 2 * qt * d_model * 4            # q blocks (double-buffered)
        b += 2 * 2 * kt * d_model * 4       # k + v blocks
        b += 2 * qt * d_model * 4           # out blocks
        b += qt * d_model * 4               # acc scratch
        if masked:
            b += 2 * qt * kt                # int8 mask blocks
            b += 2 * qt * 128 * 4           # m/l scratch (lane padded)
        if fuse:
            b += 2 * (d_model * d_model + d_model) * 4
        return b

    fuse = est(q_tile, kv_tile, True) <= budget
    while kv_tile > 128 and kv_tile % 128 == 0 and est(q_tile, kv_tile, fuse) > budget:
        kv_tile //= 2
    while q_tile > 8 and est(q_tile, kv_tile, fuse) > budget:
        q_tile = max(8, _round_up(q_tile // 2, 8))
    return q_tile, kv_tile, fuse


def pallas_attention(qp, kp, vp, mask, wo_t, bo, heads, d_k, budget):
    """qp/kp/vp: (bs, S, d_model) packed-head layout; qp pre-scaled by
    1/sqrt(d_k); mask: (bs, S, S) or None.  Returns (output, fused_flag) where
    output is the final module output if fused_flag else the concat slab."""
    bs, S, d_model = qp.shape
    masked = mask is not None
    q_tile, kv_tile, fuse = _attn_plan(S, d_model, budget, masked)
    kv_pad = (S % kv_tile) != 0
    grid = (bs, pl.cdiv(S, q_tile), pl.cdiv(S, kv_tile))

    q_spec = pl.BlockSpec((None, q_tile, d_model), lambda b, qi, ki: (b, qi, 0))
    kv_spec = pl.BlockSpec((None, kv_tile, d_model), lambda b, qi, ki: (b, ki, 0))
    o_spec = pl.BlockSpec((None, q_tile, d_model), lambda b, qi, ki: (b, qi, 0))

    in_specs = [q_spec, kv_spec, kv_spec]
    args = [qp, kp, vp]
    if masked:
        in_specs.append(pl.BlockSpec((None, q_tile, kv_tile),
                                     lambda b, qi, ki: (b, qi, ki)))
        args.append((mask != 0).astype(jnp.int8))     # safe int8: no wraparound
    if fuse:
        in_specs.append(pl.BlockSpec((d_model, d_model), lambda b, qi, ki: (0, 0)))
        in_specs.append(pl.BlockSpec((1, d_model), lambda b, qi, ki: (0, 0)))
        args.append(wo_t)
        args.append(bo.reshape(1, d_model))

    scratch = [pltpu.VMEM((q_tile, d_model), jnp.float32)]
    if masked:
        scratch += [pltpu.VMEM((q_tile, heads), jnp.float32),
                    pltpu.VMEM((q_tile, heads), jnp.float32)]

    flops = 4 * bs * S * S * d_model
    bytes_accessed = 4 * bs * S * d_model * 4
    transcendentals = 0
    if masked:
        transcendentals = bs * heads * S * S
        bytes_accessed += bs * S * S
    if fuse:
        flops += 2 * bs * S * d_model * d_model
        bytes_accessed += (d_model * d_model + d_model) * 4

    kern = partial(_attn_kernel, heads=heads, d_k=d_k, s_len=S,
                   kv_tile=kv_tile, kv_pad=kv_pad, masked=masked, fuse=fuse)

    out = pl.pallas_call(
        kern,
        out_shape=jax.ShapeDtypeStruct((bs, S, d_model), jnp.float32),
        grid=grid,
        in_specs=in_specs,
        out_specs=o_spec,
        scratch_shapes=scratch,
        compiler_params=pltpu.CompilerParams(
            dimension_semantics=("parallel", "parallel", "arbitrary"),
            vmem_limit_bytes=budget),
        cost_estimate=pl.CostEstimate(flops=flops,
                                      transcendentals=transcendentals,
                                      bytes_accessed=bytes_accessed),
    )(*args)
    return out, fuse


# ----------------------------------------------------------------------------
# Full module forward
# ----------------------------------------------------------------------------
def multi_head_attention(params, q, k, v, mask=None):
    bs, S, d_model = q.shape
    heads = params["heads"]
    d_k = d_model // heads
    budget = _vmem_budget()
    q_scale = 1.0 / math.sqrt(d_k)

    q2d = q.reshape(bs * S, d_model)
    k2d = k.reshape(bs * S, d_model)
    v2d = v.reshape(bs * S, d_model)

    qp, kp, vp = pallas_qkv_proj(
        q2d, k2d, v2d,
        params["wq_t"], params["wk_t"], params["wv_t"],
        params["bq"], params["bk"], params["bv"],
        q_scale=q_scale, budget=budget)

    qp = qp.reshape(bs, S, d_model)
    kp = kp.reshape(bs, S, d_model)
    vp = vp.reshape(bs, S, d_model)

    if mask is not None:
        mask = jnp.broadcast_to(mask, (bs, S, S))

    out, fused = pallas_attention(qp, kp, vp, mask,
                                  params["wo_t"], params["bo"],
                                  heads, d_k, budget)
    if not fused:
        out = pallas_linear(out.reshape(bs * S, d_model),
                            params["wo_t"], params["bo"],
                            budget=budget).reshape(bs, S, d_model)
    return out


# ----------------------------------------------------------------------------
# Pure-JAX reference (for correctness check)
# ----------------------------------------------------------------------------
def reference_mha(params, q, k, v, mask=None):
    bs, S, d_model = q.shape
    h = params["heads"]
    d_k = d_model // h

    def lin(x, wt, b):
        return x @ wt + b

    def split(x):
        return x.reshape(bs, S, h, d_k).transpose(0, 2, 1, 3)

    qh = split(lin(q, params["wq_t"], params["bq"]))
    kh = split(lin(k, params["wk_t"], params["bk"]))
    vh = split(lin(v, params["wv_t"], params["bv"]))

    s = jnp.einsum("bhqd,bhkd->bhqk", qh, kh) / math.sqrt(d_k)
    if mask is not None:
        s = jnp.where(mask[:, None, :, :] == 0, -1e9, s)
        s = jax.nn.softmax(s, axis=-1)
    o = jnp.einsum("bhqk,bhkd->bhqd", s, vh)
    concat = o.transpose(0, 2, 1, 3).reshape(bs, S, d_model)
    return lin(concat, params["wo_t"], params["bo"])


# ----------------------------------------------------------------------------
def init_params(key, d_model, heads):
    ks = jax.random.split(key, 8)
    scale = 1.0 / math.sqrt(d_model)

    # PyTorch stores W as (out, in); pre-transpose ONCE here so the forward
    # pass never materializes a transposed weight copy in HBM.
    def wt(kk):
        w = jax.random.normal(kk, (d_model, d_model), jnp.float32) * scale
        return w.T                                   # stored (d_in, d_out)

    def b(kk):
        return jax.random.normal(kk, (d_model,), jnp.float32) * scale

    return {
        "heads": heads,
        "wq_t": wt(ks[0]), "bq": b(ks[1]),
        "wk_t": wt(ks[2]), "bk": b(ks[3]),
        "wv_t": wt(ks[4]), "bv": b(ks[5]),
        "wo_t": wt(ks[6]), "bo": b(ks[7]),
    }


if __name__ == "__main__":
    bs, S, d_model, heads = 2, 8, 32, 4

    key = jax.random.PRNGKey(0)
    kp_, kq_, kk_, kv_ = jax.random.split(key, 4)
    params = init_params(kp_, d_model, heads)

    q = jax.random.normal(kq_, (bs, S, d_model), jnp.float32)
    k = jax.random.normal(kk_, (bs, S, d_model), jnp.float32)
    v = jax.random.normal(kv_, (bs, S, d_model), jnp.float32)
    # causal mask, broadcast over heads (mask.unsqueeze(1) in the reference)
    mask = jnp.tril(jnp.ones((S, S), jnp.int32))[None, :, :].repeat(bs, axis=0)

    # masked path (softmax)
    out = multi_head_attention(params, q, k, v, mask)
    out = jax.block_until_ready(out)
    ref = reference_mha(params, q, k, v, mask)
    assert out.shape == (bs, S, d_model)
    assert jnp.allclose(out, ref, atol=1e-4, rtol=1e-4), "masked path mismatch"

    # mask=None path (reference applies no softmax)
    out_nm = multi_head_attention(params, q, k, v, None)
    out_nm = jax.block_until_ready(out_nm)
    ref_nm = reference_mha(params, q, k, v, None)
    assert jnp.allclose(out_nm, ref_nm, atol=1e-4, rtol=1e-4), "no-mask path mismatch"

    print("KERNEL_OK")
</pallas_src>

<mosaic_0001>
module attributes {stable_mosaic.version = 11 : i64} {
  func.func @_qkv_kernel_resident(%arg0: i32, %arg1: memref<16x32xf32, #tpu.memory_space<vmem>>, %arg2: memref<16x32xf32, #tpu.memory_space<vmem>>, %arg3: memref<16x32xf32, #tpu.memory_space<vmem>>, %arg4: memref<32x32xf32, #tpu.memory_space<vmem>>, %arg5: memref<32x32xf32, #tpu.memory_space<vmem>>, %arg6: memref<32x32xf32, #tpu.memory_space<vmem>>, %arg7: memref<1x32xf32, #tpu.memory_space<vmem>>, %arg8: memref<1x32xf32, #tpu.memory_space<vmem>>, %arg9: memref<1x32xf32, #tpu.memory_space<vmem>>, %arg10: memref<16x32xf32, #tpu.memory_space<vmem>>, %arg11: memref<16x32xf32, #tpu.memory_space<vmem>>, %arg12: memref<16x32xf32, #tpu.memory_space<vmem>>) attributes {dimension_semantics = [#tpu.dimension_semantics<parallel>], iteration_bounds = array<i64: 1>, scalar_prefetch = 0 : i64, scratch_operands = 0 : i64, tpu.core_type = #tpu.core_type<tc>, window_params = [{transform_indices = @transform_0, window_bounds = array<i64: 16, 32>}, {transform_indices = @transform_1, window_bounds = array<i64: 16, 32>}, {transform_indices = @transform_2, window_bounds = array<i64: 16, 32>}, {pipeline_mode = #tpu.pipeline_mode<synchronous>, transform_indices = @transform_3, window_bounds = array<i64: 32, 32>}, {pipeline_mode = #tpu.pipeline_mode<synchronous>, transform_indices = @transform_4, window_bounds = array<i64: 32, 32>}, {pipeline_mode = #tpu.pipeline_mode<synchronous>, transform_indices = @transform_5, window_bounds = array<i64: 32, 32>}, {pipeline_mode = #tpu.pipeline_mode<synchronous>, transform_indices = @transform_6, window_bounds = array<i64: 1, 32>}, {pipeline_mode = #tpu.pipeline_mode<synchronous>, transform_indices = @transform_7, window_bounds = array<i64: 1, 32>}, {pipeline_mode = #tpu.pipeline_mode<synchronous>, transform_indices = @transform_8, window_bounds = array<i64: 1, 32>}, {transform_indices = @transform_9, window_bounds = array<i64: 16, 32>}, {transform_indices = @transform_10, window_bounds = array<i64: 16, 32>}, {transform_indices = @transform_11, window_bounds = array<i64: 16, 32>}]} {
    %c0 = arith.constant 0 : index
    %c0_0 = arith.constant 0 : index
    %0 = vector.load %arg1[%c0, %c0_0] : memref<16x32xf32, #tpu.memory_space<vmem>>, vector<16x32xf32>
    %c0_1 = arith.constant 0 : index
    %c0_2 = arith.constant 0 : index
    %1 = vector.load %arg4[%c0_1, %c0_2] : memref<32x32xf32, #tpu.memory_space<vmem>>, vector<32x32xf32>
    %cst = arith.constant dense<0.000000e+00> : vector<16x32xf32>
    %2 = tpu.matmul %0, %1, %cst {dimension_numbers = #tpu.dot_dimension_numbers<[1], [0], [0], [1], [0, 0, 1, 1], [], []>} : vector<16x32xf32>, vector<32x32xf32>, vector<16x32xf32> -> vector<16x32xf32>
    %c0_3 = arith.constant 0 : index
    %c0_4 = arith.constant 0 : index
    %3 = vector.load %arg7[%c0_3, %c0_4] : memref<1x32xf32, #tpu.memory_space<vmem>>, vector<1x32xf32>
    %4 = vector.broadcast %3 : vector<1x32xf32> to vector<16x32xf32>
    %5 = arith.addf %2, %4 : vector<16x32xf32>
    %cst_5 = arith.constant 0.353553385 : f32
    %6 = vector.broadcast %cst_5 : f32 to vector<16x32xf32>
    %7 = arith.mulf %5, %6 : vector<16x32xf32>
    %c0_6 = arith.constant 0 : index
    %c0_7 = arith.constant 0 : index
    %8 = vector.load %arg10[%c0_6, %c0_7] : memref<16x32xf32, #tpu.memory_space<vmem>>, vector<16x32xf32>
    tpu.vector_store %arg10[%c0_6, %c0_7], %7 {strides = array<i32>} : memref<16x32xf32, #tpu.memory_space<vmem>>, vector<16x32xf32>,
    %c0_8 = arith.constant 0 : index
    %c0_9 = arith.constant 0 : index
    %9 = vector.load %arg2[%c0_8, %c0_9] : memref<16x32xf32, #tpu.memory_space<vmem>>, vector<16x32xf32>
    %c0_10 = arith.constant 0 : index
    %c0_11 = arith.constant 0 : index
    %10 = vector.load %arg5[%c0_10, %c0_11] : memref<32x32xf32, #tpu.memory_space<vmem>>, vector<32x32xf32>
    %cst_12 = arith.constant dense<0.000000e+00> : vector<16x32xf32>
    %11 = tpu.matmul %9, %10, %cst_12 {dimension_numbers = #tpu.dot_dimension_numbers<[1], [0], [0], [1], [0, 0, 1, 1], [], []>} : vector<16x32xf32>, vector<32x32xf32>, vector<16x32xf32> -> vector<16x32xf32>
    %c0_13 = arith.constant 0 : index
    %c0_14 = arith.constant 0 : index
    %12 = vector.load %arg8[%c0_13, %c0_14] : memref<1x32xf32, #tpu.memory_space<vmem>>, vector<1x32xf32>
    %13 = vector.broadcast %12 : vector<1x32xf32> to vector<16x32xf32>
    %14 = arith.addf %11, %13 : vector<16x32xf32>
    %c0_15 = arith.constant 0 : index
    %c0_16 = arith.constant 0 : index
    %15 = vector.load %arg11[%c0_15, %c0_16] : memref<16x32xf32, #tpu.memory_space<vmem>>, vector<16x32xf32>
    tpu.vector_store %arg11[%c0_15, %c0_16], %14 {strides = array<i32>} : memref<16x32xf32, #tpu.memory_space<vmem>>, vector<16x32xf32>,
    %c0_17 = arith.constant 0 : index
    %c0_18 = arith.constant 0 : index
    %16 = vector.load %arg3[%c0_17, %c0_18] : memref<16x32xf32, #tpu.memory_space<vmem>>, vector<16x32xf32>
    %c0_19 = arith.constant 0 : index
    %c0_20 = arith.constant 0 : index
    %17 = vector.load %arg6[%c0_19, %c0_20] : memref<32x32xf32, #tpu.memory_space<vmem>>, vector<32x32xf32>
    %cst_21 = arith.constant dense<0.000000e+00> : vector<16x32xf32>
    %18 = tpu.matmul %16, %17, %cst_21 {dimension_numbers = #tpu.dot_dimension_numbers<[1], [0], [0], [1], [0, 0, 1, 1], [], []>} : vector<16x32xf32>, vector<32x32xf32>, vector<16x32xf32> -> vector<16x32xf32>
    %c0_22 = arith.constant 0 : index
    %c0_23 = arith.constant 0 : index
    %19 = vector.load %arg9[%c0_22, %c0_23] : memref<1x32xf32, #tpu.memory_space<vmem>>, vector<1x32xf32>
    %20 = vector.broadcast %19 : vector<1x32xf32> to vector<16x32xf32>
    %21 = arith.addf %18, %20 : vector<16x32xf32>
    %c0_24 = arith.constant 0 : index
    %c0_25 = arith.constant 0 : index
    %22 = vector.load %arg12[%c0_24, %c0_25] : memref<16x32xf32, #tpu.memory_space<vmem>>, vector<16x32xf32>
    tpu.vector_store %arg12[%c0_24, %c0_25], %21 {strides = array<i32>} : memref<16x32xf32, #tpu.memory_space<vmem>>, vector<16x32xf32>,
    return
  }
  func.func @transform_0(%arg0: i32) -> (i32, i32) {
    %c0_i32 = arith.constant 0 : i32
    %c0_i32_0 = arith.constant 0 : i32
    return %arg0, %c0_i32 : i32, i32
  }
  func.func @transform_1(%arg0: i32) -> (i32, i32) {
    %c0_i32 = arith.constant 0 : i32
    %c0_i32_0 = arith.constant 0 : i32
    return %arg0, %c0_i32 : i32, i32
  }
  func.func @transform_2(%arg0: i32) -> (i32, i32) {
    %c0_i32 = arith.constant 0 : i32
    %c0_i32_0 = arith.constant 0 : i32
    return %arg0, %c0_i32 : i32, i32
  }
  func.func @transform_3(%arg0: i32) -> (i32, i32) {
    %c0_i32 = arith.constant 0 : i32
    %c0_i32_0 = arith.constant 0 : i32
    %c0_i32_1 = arith.constant 0 : i32
    return %c0_i32, %c0_i32_0 : i32, i32
  }
  func.func @transform_4(%arg0: i32) -> (i32, i32) {
    %c0_i32 = arith.constant 0 : i32
    %c0_i32_0 = arith.constant 0 : i32
    %c0_i32_1 = arith.constant 0 : i32
    return %c0_i32, %c0_i32_0 : i32, i32
  }
  func.func @transform_5(%arg0: i32) -> (i32, i32) {
    %c0_i32 = arith.constant 0 : i32
    %c0_i32_0 = arith.constant 0 : i32
    %c0_i32_1 = arith.constant 0 : i32
    return %c0_i32, %c0_i32_0 : i32, i32
  }
  func.func @transform_6(%arg0: i32) -> (i32, i32) {
    %c0_i32 = arith.constant 0 : i32
    %c0_i32_0 = arith.constant 0 : i32
    %c0_i32_1 = arith.constant 0 : i32
    return %c0_i32, %c0_i32_0 : i32, i32
  }
  func.func @transform_7(%arg0: i32) -> (i32, i32) {
    %c0_i32 = arith.constant 0 : i32
    %c0_i32_0 = arith.constant 0 : i32
    %c0_i32_1 = arith.constant 0 : i32
    return %c0_i32, %c0_i32_0 : i32, i32
  }
  func.func @transform_8(%arg0: i32) -> (i32, i32) {
    %c0_i32 = arith.constant 0 : i32
    %c0_i32_0 = arith.constant 0 : i32
    %c0_i32_1 = arith.constant 0 : i32
    return %c0_i32, %c0_i32_0 : i32, i32
  }
  func.func @transform_9(%arg0: i32) -> (i32, i32) {
    %c0_i32 = arith.constant 0 : i32
    %c0_i32_0 = arith.constant 0 : i32
    return %arg0, %c0_i32 : i32, i32
  }
  func.func @transform_10(%arg0: i32) -> (i32, i32) {
    %c0_i32 = arith.constant 0 : i32
    %c0_i32_0 = arith.constant 0 : i32
    return %arg0, %c0_i32 : i32, i32
  }
  func.func @transform_11(%arg0: i32) -> (i32, i32) {
    %c0_i32 = arith.constant 0 : i32
    %c0_i32_0 = arith.constant 0 : i32
    return %arg0, %c0_i32 : i32, i32
  }
}

</mosaic_0001>

<llo_original>
// kernel: tpu_custom_call.1
$region0: #{tpu_custom_call.1}
  #allocation0 [shape = 'u32[]', space=smem, size = 0x4, offset = 0x4, fixed_abs, tag = 'smem constant byte address 0x4 - core index']
  #allocation1 [shape = 'u32[144,128]{1,0:T(1,128)}', space=vmem, size = 0x12000, scoped, tag = 'internal scratch']
  %s0 = inlined_call_operand.hbm [shape: f32[16,32], index: 0, kind: input, shape index: {}]
  %s1 = inlined_call_operand.hbm [shape: f32[16,32], index: 1, kind: input, shape index: {}]
  %s2 = inlined_call_operand.hbm [shape: f32[16,32], index: 2, kind: input, shape index: {}]
  %s3 = inlined_call_operand.hbm [shape: f32[32,32], index: 3, kind: input, shape index: {}]
  %s4 = inlined_call_operand.hbm [shape: f32[32,32], index: 4, kind: input, shape index: {}]
  %s5 = inlined_call_operand.hbm [shape: f32[32,32], index: 5, kind: input, shape index: {}]
  %s6 = inlined_call_operand.vmem [shape: f32[1,32], index: 6, kind: input, shape index: {}]
  %s7 = inlined_call_operand.vmem [shape: f32[1,32], index: 7, kind: input, shape index: {}]
  %s8 = inlined_call_operand.vmem [shape: f32[1,32], index: 8, kind: input, shape index: {}]
  %s9 = inlined_call_operand.hbm [shape: f32[16,32], index: 9, kind: output, shape index: {0}]
  %s10 = inlined_call_operand.hbm [shape: f32[16,32], index: 10, kind: output, shape index: {1}]
  %s11 = inlined_call_operand.hbm [shape: f32[16,32], index: 11, kind: output, shape index: {2}]
  %12 = xla_tuple %s9, %s10, %s11
  %s13 = sld [smem:[#allocation0]]
  $region86: #{tpu_custom_call.1} parent=0
    _
  %s15 = ssub.s32 1, %s13
  %s16 = scalar_select 0, %s15, %s13
  $region1: #{tpu_custom_call.1} parent=0
    #allocation2 [shape = 'u8[8192]{0}', space=vmem, size = 0x2000, scoped, tag = 'input window, operand 0, single buffered']
    #allocation3 [shape = 's32[1]{0}', space=sflag, size = 0x4, scoped, tag = 'scoped memory for tpu_custom_call.1']
    #allocation4 [shape = 's32[1]{0}', space=sflag, size = 0x4, scoped, tag = 'scoped memory for tpu_custom_call.1']
    #allocation5 [shape = 'u8[8192]{0}', space=vmem, size = 0x2000, scoped, tag = 'input window, operand 1, single buffered']
    #allocation6 [shape = 's32[1]{0}', space=sflag, size = 0x4, scoped, tag = 'scoped memory for tpu_custom_call.1']
    #allocation7 [shape = 'u8[8192]{0}', space=vmem, size = 0x2000, scoped, tag = 'input window, operand 2, single buffered']
    #allocation8 [shape = 'u8[16384]{0}', space=vmem, size = 0x4000, scoped, tag = 'input window, operand 3, single buffered']
    #allocation9 [shape = 's32[1]{0}', space=sflag, size = 0x4, scoped, tag = 'scoped memory for tpu_custom_call.1']
    #allocation10 [shape = 'u8[16384]{0}', space=vmem, size = 0x4000, scoped, tag = 'input window, operand 4, single buffered']
    #allocation11 [shape = 'u8[16384]{0}', space=vmem, size = 0x4000, scoped, tag = 'input window, operand 5, single buffered']
    #allocation12 [shape = 's32[1]{0}', space=sflag, size = 0x4, scoped, tag = 'scoped memory for tpu_custom_call.1']
    #allocation13 [shape = 'u8[8192]{0}', space=vmem, size = 0x2000, scoped, tag = 'output window, operand 0, single buffered']
    #allocation14 [shape = 'u8[8192]{0}', space=vmem, size = 0x2000, scoped, tag = 'output window, operand 1, single buffered']
    #allocation15 [shape = 's32[1]{0}', space=sflag, size = 0x4, scoped, tag = 'scoped memory for tpu_custom_call.1']
    #allocation16 [shape = 'u8[8192]{0}', space=vmem, size = 0x2000, scoped, tag = 'output window, operand 2, single buffered']
    %17 = vsyncpa [#allocation3], 0
    %18 = vsyncpa [#allocation6], 0
    %19 = vsyncpa [#allocation9], 0
    %20 = vsyncpa [#allocation12], 0
    %21 = vsyncpa [#allocation4], 0
    %22 = vsyncpa [#allocation15], 0
    // Predicated region
    $region2: #{tpu_custom_call.1} parent=1 // pred_check
      _
    $region3: #{tpu_custom_call.1} parent=1 // pred_check_branch
      %24 = sbr.rel (0) target = $region5
    $region4: #{tpu_custom_call.1} parent=1 // pred_region
      %s26 = ssub.s32 256, 256
      %27 = vsyncadd [#allocation3], %s26
      %s28 = sshll.u32 [#allocation2], 4
      %s29 = int_to_ptr.vmem [resolvable:$true] %s28
      %34 = dma.hbm_to_vmem [thread:$0]  %s0, 256, %s29, [#allocation3], 128, 128, 8
    $region5: #{tpu_custom_call.1} parent=1 // pred_fallthru
      _
    // Predicated region
    $region6: #{tpu_custom_call.1} parent=1 // pred_check
      _
    $region7: #{tpu_custom_call.1} parent=1 // pred_check_branch
      %36 = sbr.rel (0) target = $region9
    $region8: #{tpu_custom_call.1} parent=1 // pred_region
      %s38 = ssub.s32 256, 256
      %39 = vsyncadd [#allocation6], %s38
      %s40 = sshll.u32 [#allocation5], 4
      %s41 = int_to_ptr.vmem [resolvable:$true] %s40
      %46 = dma.hbm_to_vmem [thread:$0]  %s1, 256, %s41, [#allocation6], 128, 128, 8
    $region9: #{tpu_custom_call.1} parent=1 // pred_fallthru
      _
    // Predicated region
    $region10: #{tpu_custom_call.1} parent=1 // pred_check
      _
    $region11: #{tpu_custom_call.1} parent=1 // pred_check_branch
      %48 = sbr.rel (0) target = $region13
    $region12: #{tpu_custom_call.1} parent=1 // pred_region
      %s50 = ssub.s32 256, 256
      %51 = vsyncadd [#allocation6], %s50
      %s52 = sshll.u32 [#allocation7], 4
      %s53 = int_to_ptr.vmem [resolvable:$true] %s52
      %58 = dma.hbm_to_vmem [thread:$0]  %s2, 256, %s53, [#allocation6], 128, 128, 8
    $region13: #{tpu_custom_call.1} parent=1 // pred_fallthru
      _
    // Predicated region
    $region14: #{tpu_custom_call.1} parent=1 // pred_check
      _
    $region15: #{tpu_custom_call.1} parent=1 // pred_check_branch
      %60 = sbr.rel (0) target = $region17
    $region16: #{tpu_custom_call.1} parent=1 // pred_region
      %s62 = ssub.s32 512, 512
      %63 = vsyncadd [#allocation9], %s62
      %s64 = sshll.u32 [#allocation8], 4
      %s65 = int_to_ptr.vmem [resolvable:$true] %s64
      %70 = dma.hbm_to_vmem [thread:$0]  %s3, 512, %s65, [#allocation9], 128, 128, 8
    $region17: #{tpu_custom_call.1} parent=1 // pred_fallthru
      _
    // Predicated region
    $region18: #{tpu_custom_call.1} parent=1 // pred_check
      _
    $region19: #{tpu_custom_call.1} parent=1 // pred_check_branch
      %72 = sbr.rel (0) target = $region21
    $region20: #{tpu_custom_call.1} parent=1 // pred_region
      %s74 = ssub.s32 512, 512
      %75 = vsyncadd [#allocation9], %s74
      %s76 = sshll.u32 [#allocation10], 4
      %s77 = int_to_ptr.vmem [resolvable:$true] %s76
      %82 = dma.hbm_to_vmem [thread:$0]  %s4, 512, %s77, [#allocation9], 128, 128, 8
    $region21: #{tpu_custom_call.1} parent=1 // pred_fallthru
      _
    // Predicated region
    $region22: #{tpu_custom_call.1} parent=1 // pred_check
      _
    $region23: #{tpu_custom_call.1} parent=1 // pred_check_branch
      %84 = sbr.rel (0) target = $region25
    $region24: #{tpu_custom_call.1} parent=1 // pred_region
      %s86 = ssub.s32 512, 512
      %87 = vsyncadd [#allocation12], %s86
      %s88 = sshll.u32 [#allocation11], 4
      %s89 = int_to_ptr.vmem [resolvable:$true] %s88
      %94 = dma.hbm_to_vmem [thread:$0]  %s5, 512, %s89, [#allocation12], 128, 128, 8
    $region25: #{tpu_custom_call.1} parent=1 // pred_fallthru
      _
    // Predicated region
    $region26: #{tpu_custom_call.1} parent=1 // pred_check
      _
    $region27: #{tpu_custom_call.1} parent=1 // pred_check_branch
      %96 = sbr.rel (0) target = $region29
    $region28: #{tpu_custom_call.1} parent=1 // pred_region
      _
    $region29: #{tpu_custom_call.1} parent=1 // pred_fallthru
      _
    // Predicated region
    $region30: #{tpu_custom_call.1} parent=1 // pred_check
      _
    $region31: #{tpu_custom_call.1} parent=1 // pred_check_branch
      %98 = sbr.rel (0) target = $region33
    $region32: #{tpu_custom_call.1} parent=1 // pred_region
      _
    $region33: #{tpu_custom_call.1} parent=1 // pred_fallthru
      _
    // Predicated region
    $region34: #{tpu_custom_call.1} parent=1 // pred_check
      _
    $region35: #{tpu_custom_call.1} parent=1 // pred_check_branch
      %100 = sbr.rel (0) target = $region37
    $region36: #{tpu_custom_call.1} parent=1 // pred_region
      _
    $region37: #{tpu_custom_call.1} parent=1 // pred_fallthru
      _
    // Predicated region
    $region38: #{tpu_custom_call.1} parent=1 // pred_check
      _
    $region39: #{tpu_custom_call.1} parent=1 // pred_check_branch
      %102 = sbr.rel (0) target = $region41
    $region40: #{tpu_custom_call.1} parent=1 // pred_region
      %103 = dma.done [#allocation3], 256
    $region41: #{tpu_custom_call.1} parent=1 // pred_fallthru
      _
    // Predicated region
    $region42: #{tpu_custom_call.1} parent=1 // pred_check
      _
    $region43: #{tpu_custom_call.1} parent=1 // pred_check_branch
      %105 = sbr.rel (0) target = $region45
    $region44: #{tpu_custom_call.1} parent=1 // pred_region
      %106 = dma.done [#allocation6], 256
    $region45: #{tpu_custom_call.1} parent=1 // pred_fallthru
      _
    // Predicated region
    $region46: #{tpu_custom_call.1} parent=1 // pred_check
      _
    $region47: #{tpu_custom_call.1} parent=1 // pred_check_branch
      %108 = sbr.rel (0) target = $region49
    $region48: #{tpu_custom_call.1} parent=1 // pred_region
      %109 = dma.done [#allocation6], 256
    $region49: #{tpu_custom_call.1} parent=1 // pred_fallthru
      _
    // Predicated region
    $region50: #{tpu_custom_call.1} parent=1 // pred_check
      _
    $region51: #{tpu_custom_call.1} parent=1 // pred_check_branch
      %111 = sbr.rel (0) target = $region53
    $region52: #{tpu_custom_call.1} parent=1 // pred_region
      %112 = dma.done [#allocation9], 512
    $region53: #{tpu_custom_call.1} parent=1 // pred_fallthru
      _
    // Predicated region
    $region54: #{tpu_custom_call.1} parent=1 // pred_check
      _
    $region55: #{tpu_custom_call.1} parent=1 // pred_check_branch
      %114 = sbr.rel (0) target = $region57
    $region56: #{tpu_custom_call.1} parent=1 // pred_region
      %115 = dma.done [#allocation9], 512
    $region57: #{tpu_custom_call.1} parent=1 // pred_fallthru
      _
    // Predicated region
    $region58: #{tpu_custom_call.1} parent=1 // pred_check
      _
    $region59: #{tpu_custom_call.1} parent=1 // pred_check_branch
      %117 = sbr.rel (0) target = $region61
    $region60: #{tpu_custom_call.1} parent=1 // pred_region
      %118 = dma.done [#allocation12], 512
    $region61: #{tpu_custom_call.1} parent=1 // pred_fallthru
      _
    %v119 = vld [vmem:[#allocation2] sm:$0xff]
    %v120 = vld [vmem:[#allocation2 + $0x8] sm:$0xff]
    %v121 = vld [vmem:[#allocation8] sm:$0xff]
    %v122 = vld [vmem:[#allocation8 + $0x8] sm:$0xff]
    %v123 = vld [vmem:[#allocation8 + $0x10] sm:$0xff]
    %v124 = vld [vmem:[#allocation8 + $0x18] sm:$0xff]
    %v125 = vld [vmem:[%s6] sm:$0x1]
    %v127 = vlaneseq
    %v128 = vshrl.u32 %v127, 7
    %v129 = vsub.s32 0, %v128
    %v130 = vrot.slane %v125, %v129
    %vm132 = vcmask 261120
    %v134 = vsel %vm132, %v119, 0
    %v137 = vsel %vm132, %v120, 0
    %139 = vmatprep.subr.mxu0 0.0
    %140 = vmatpush1.msra.mxu0 0.0
    %141 = vmatprep.subr.mxu0 0.0
    %142 = vmatpush1.msra.mxu0 0.0
    %143 = vmatprep.subr.mxu0 0.0
    %144 = vmatpush1.msra.mxu0 0.0
    %145 = vmatprep.subr.mxu0 0.0
    %146 = vmatpush1.msra.mxu0 0.0
    %147 = vmatprep.subr.mxu0 0.0
    %148 = vmatpush1.msra.mxu0 0.0
    %149 = vmatprep.subr.mxu0 0.0
    %150 = vmatpush1.msra.mxu0 0.0
    %151 = vmatprep.subr.mxu0 0.0
    %152 = vmatpush1.msra.mxu0 0.0
    %153 = vmatprep.subr.mxu0 0.0
    %154 = vmatpush1.msra.mxu0 0.0
    %155 = vmatprep.subr.mxu0 0.0
    %156 = vmatpush1.msra.mxu0 0.0
    %157 = vmatprep.subr.mxu0 0.0
    %158 = vmatpush1.msra.mxu0 0.0
    %159 = vmatprep.subr.mxu0 0.0
    %160 = vmatpush1.msra.mxu0 0.0
    %161 = vmatprep.subr.mxu0 0.0
    %162 = vmatpush1.msra.mxu0 0.0
    %163 = vmatprep.subr.mxu0 0.0
    %164 = vmatpush1.msra.mxu0 %v124
    %165 = vmatprep.subr.mxu0 0.0
    %166 = vmatpush1.msra.mxu0 %v123
    %167 = vmatprep.subr.mxu0 0.0
    %168 = vmatpush1.msra.mxu0 %v122
    %169 = vmatprep.subr.mxu0 0.0
    %170 = vmatpush1.msra.mxu0 %v121
    %171 = vmatprep.subr.mxu0 0.0
    %172 = vmatpush2.msra.mxu0 0.0
    %173 = vmatprep.subr.mxu0 0.0
    %174 = vmatpush2.msra.mxu0 0.0
    %175 = vmatprep.subr.mxu0 0.0
    %176 = vmatpush2.msra.mxu0 0.0
    %177 = vmatprep.subr.mxu0 0.0
    %178 = vmatpush2.msra.mxu0 0.0
    %179 = vmatprep.subr.mxu0 0.0
    %180 = vmatpush2.msra.mxu0 0.0
    %181 = vmatprep.subr.mxu0 0.0
    %182 = vmatpush2.msra.mxu0 0.0
    %183 = vmatprep.subr.mxu0 0.0
    %184 = vmatpush2.msra.mxu0 0.0
    %185 = vmatprep.subr.mxu0 0.0
    %186 = vmatpush2.msra.mxu0 0.0
    %187 = vmatprep.subr.mxu0 0.0
    %188 = vmatpush2.msra.mxu0 0.0
    %189 = vmatprep.subr.mxu0 0.0
    %190 = vmatpush2.msra.mxu0 0.0
    %191 = vmatprep.subr.mxu0 0.0
    %192 = vmatpush2.msra.mxu0 0.0
    %193 = vmatprep.subr.mxu0 0.0
    %194 = vmatpush2.msra.mxu0 0.0
    %195 = vmatprep.subr.mxu0 0.0
    %196 = vmatpush2.msra.mxu0 0.0
    %197 = vmatprep.subr.mxu0 0.0
    %198 = vmatpush2.msra.mxu0 0.0
    %199 = vmatprep.subr.mxu0 0.0
    %200 = vmatpush2.msra.mxu0 0.0
    %201 = vmatprep.subr.mxu0 0.0
    %202 = vmatpush2.msra.mxu0 0.0
    %203 = vmatprep.mubr.f32.mxu0 0.0
    %204 = vmatmul.mubr.f32.gmra.mxu0 %v134
    %v205 = vpop.f32.mrf.mxu0
    %v206 = vadd.f32 %v130, %v205
    %v207 = vpop.f32.mrf.mxu0
    %208 = vmatprep.mubr.f32.mxu0 0.0
    %209 = vmatmul.mubr.f32.gmra.mxu0 %v137
    %v210 = vpop.f32.mrf.mxu0
    %v211 = vadd.f32 %v130, %v210
    %v212 = vpop.f32.mrf.mxu0
    %213 = vdwg.mxu0
    %v214 = vmul.f32 %v206, 0.35355338
    %v215 = vmul.f32 %v211, 0.35355338
    %216 = vst.msk [vmem:[#allocation13] sm:$0xff] %vm132, %v214
    %217 = vst.msk [vmem:[#allocation13 + $0x8] sm:$0xff] %vm132, %v215
    %v218 = vld [vmem:[#allocation5] sm:$0xff]
    %v219 = vld [vmem:[#allocation5 + $0x8] sm:$0xff]
    %v220 = vld [vmem:[#allocation10] sm:$0xff]
    %v221 = vld [vmem:[#allocation10 + $0x8] sm:$0xff]
    %v222 = vld [vmem:[#allocation10 + $0x10] sm:$0xff]
    %v223 = vld [vmem:[#allocation10 + $0x18] sm:$0xff]
    %v224 = vld [vmem:[%s7] sm:$0x1]
    %v226 = vlaneseq
    %v227 = vshrl.u32 %v226, 7
    %v228 = vsub.s32 0, %v227
    %v229 = vrot.slane %v224, %v228
    %v232 = vsel %vm132, %v218, 0
    %v235 = vsel %vm132, %v219, 0
    %237 = vmatprep.subr.mxu0 0.0
    %238 = vmatpush1.msra.mxu0 0.0
    %239 = vmatprep.subr.mxu0 0.0
    %240 = vmatpush1.msra.mxu0 0.0
    %241 = vmatprep.subr.mxu0 0.0
    %242 = vmatpush1.msra.mxu0 0.0
    %243 = vmatprep.subr.mxu0 0.0
    %244 = vmatpush1.msra.mxu0 0.0
    %245 = vmatprep.subr.mxu0 0.0
    %246 = vmatpush1.msra.mxu0 0.0
    %247 = vmatprep.subr.mxu0 0.0
    %248 = vmatpush1.msra.mxu0 0.0
    %249 = vmatprep.subr.mxu0 0.0
    %250 = vmatpush1.msra.mxu0 0.0
    %251 = vmatprep.subr.mxu0 0.0
    %252 = vmatpush1.msra.mxu0 0.0
    %253 = vmatprep.subr.mxu0 0.0
    %254 = vmatpush1.msra.mxu0 0.0
    %255 = vmatprep.subr.mxu0 0.0
    %256 = vmatpush1.msra.mxu0 0.0
    %257 = vmatprep.subr.mxu0 0.0
    %258 = vmatpush1.msra.mxu0 0.0
    %259 = vmatprep.subr.mxu0 0.0
    %260 = vmatpush1.msra.mxu0 0.0
    %261 = vmatprep.subr.mxu0 0.0
    %262 = vmatpush1.msra.mxu0 %v223
    %263 = vmatprep.subr.mxu0 0.0
    %264 = vmatpush1.msra.mxu0 %v222
    %265 = vmatprep.subr.mxu0 0.0
    %266 = vmatpush1.msra.mxu0 %v221
    %267 = vmatprep.subr.mxu0 0.0
    %268 = vmatpush1.msra.mxu0 %v220
    %269 = vmatprep.subr.mxu0 0.0
    %270 = vmatpush2.msra.mxu0 0.0
    %271 = vmatprep.subr.mxu0 0.0
    %272 = vmatpush2.msra.mxu0 0.0
    %273 = vmatprep.subr.mxu0 0.0
    %274 = vmatpush2.msra.mxu0 0.0
    %275 = vmatprep.subr.mxu0 0.0
    %276 = vmatpush2.msra.mxu0 0.0
    %277 = vmatprep.subr.mxu0 0.0
    %278 = vmatpush2.msra.mxu0 0.0
    %279 = vmatprep.subr.mxu0 0.0
    %280 = vmatpush2.msra.mxu0 0.0
    %281 = vmatprep.subr.mxu0 0.0
    %282 = vmatpush2.msra.mxu0 0.0
    %283 = vmatprep.subr.mxu0 0.0
    %284 = vmatpush2.msra.mxu0 0.0
    %285 = vmatprep.subr.mxu0 0.0
    %286 = vmatpush2.msra.mxu0 0.0
    %287 = vmatprep.subr.mxu0 0.0
    %288 = vmatpush2.msra.mxu0 0.0
    %289 = vmatprep.subr.mxu0 0.0
    %290 = vmatpush2.msra.mxu0 0.0
    %291 = vmatprep.subr.mxu0 0.0
    %292 = vmatpush2.msra.mxu0 0.0
    %293 = vmatprep.subr.mxu0 0.0
    %294 = vmatpush2.msra.mxu0 0.0
    %295 = vmatprep.subr.mxu0 0.0
    %296 = vmatpush2.msra.mxu0 0.0
    %297 = vmatprep.subr.mxu0 0.0
    %298 = vmatpush2.msra.mxu0 0.0
    %299 = vmatprep.subr.mxu0 0.0
    %300 = vmatpush2.msra.mxu0 0.0
    %301 = vmatprep.mubr.f32.mxu0 0.0
    %302 = vmatmul.mubr.f32.gmra.mxu0 %v232
    %v303 = vpop.f32.mrf.mxu0
    %v304 = vadd.f32 %v229, %v303
    %v305 = vpop.f32.mrf.mxu0
    %306 = vmatprep.mubr.f32.mxu0 0.0
    %307 = vmatmul.mubr.f32.gmra.mxu0 %v235
    %v308 = vpop.f32.mrf.mxu0
    %v309 = vadd.f32 %v229, %v308
    %v310 = vpop.f32.mrf.mxu0
    %311 = vdwg.mxu0
    %312 = vst.msk [vmem:[#allocation14] sm:$0xff] %vm132, %v304
    %313 = vst.msk [vmem:[#allocation14 + $0x8] sm:$0xff] %vm132, %v309
    %v314 = vld [vmem:[#allocation7] sm:$0xff]
    %v315 = vld [vmem:[#allocation7 + $0x8] sm:$0xff]
    %v316 = vld [vmem:[#allocation11] sm:$0xff]
    %v317 = vld [vmem:[#allocation11 + $0x8] sm:$0xff]
    %v318 = vld [vmem:[#allocation11 + $0x10] sm:$0xff]
    %v319 = vld [vmem:[#allocation11 + $0x18] sm:$0xff]
    %v320 = vld [vmem:[%s8] sm:$0x1]
    %v322 = vlaneseq
    %v323 = vshrl.u32 %v322, 7
    %v324 = vsub.s32 0, %v323
    %v325 = vrot.slane %v320, %v324
    %v328 = vsel %vm132, %v314, 0
    %v331 = vsel %vm132, %v315, 0
    %333 = vmatprep.subr.mxu0 0.0
    %334 = vmatpush1.msra.mxu0 0.0
    %335 = vmatprep.subr.mxu0 0.0
    %336 = vmatpush1.msra.mxu0 0.0
    %337 = vmatprep.subr.mxu0 0.0
    %338 = vmatpush1.msra.mxu0 0.0
    %339 = vmatprep.subr.mxu0 0.0
    %340 = vmatpush1.msra.mxu0 0.0
    %341 = vmatprep.subr.mxu0 0.0
    %342 = vmatpush1.msra.mxu0 0.0
    %343 = vmatprep.subr.mxu0 0.0
    %344 = vmatpush1.msra.mxu0 0.0
    %345 = vmatprep.subr.mxu0 0.0
    %346 = vmatpush1.msra.mxu0 0.0
    %347 = vmatprep.subr.mxu0 0.0
    %348 = vmatpush1.msra.mxu0 0.0
    %349 = vmatprep.subr.mxu0 0.0
    %350 = vmatpush1.msra.mxu0 0.0
    %351 = vmatprep.subr.mxu0 0.0
    %352 = vmatpush1.msra.mxu0 0.0
    %353 = vmatprep.subr.mxu0 0.0
    %354 = vmatpush1.msra.mxu0 0.0
    %355 = vmatprep.subr.mxu0 0.0
    %356 = vmatpush1.msra.mxu0 0.0
    %357 = vmatprep.subr.mxu0 0.0
    %358 = vmatpush1.msra.mxu0 %v319
    %359 = vmatprep.subr.mxu0 0.0
    %360 = vmatpush1.msra.mxu0 %v318
    %361 = vmatprep.subr.mxu0 0.0
    %362 = vmatpush1.msra.mxu0 %v317
    %363 = vmatprep.subr.mxu0 0.0
    %364 = vmatpush1.msra.mxu0 %v316
    %365 = vmatprep.subr.mxu0 0.0
    %366 = vmatpush2.msra.mxu0 0.0
    %367 = vmatprep.subr.mxu0 0.0
    %368 = vmatpush2.msra.mxu0 0.0
    %369 = vmatprep.subr.mxu0 0.0
    %370 = vmatpush2.msra.mxu0 0.0
    %371 = vmatprep.subr.mxu0 0.0
    %372 = vmatpush2.msra.mxu0 0.0
    %373 = vmatprep.subr.mxu0 0.0
    %374 = vmatpush2.msra.mxu0 0.0
    %375 = vmatprep.subr.mxu0 0.0
    %376 = vmatpush2.msra.mxu0 0.0
    %377 = vmatprep.subr.mxu0 0.0
    %378 = vmatpush2.msra.mxu0 0.0
    %379 = vmatprep.subr.mxu0 0.0
    %380 = vmatpush2.msra.mxu0 0.0
    %381 = vmatprep.subr.mxu0 0.0
    %382 = vmatpush2.msra.mxu0 0.0
    %383 = vmatprep.subr.mxu0 0.0
    %384 = vmatpush2.msra.mxu0 0.0
    %385 = vmatprep.subr.mxu0 0.0
    %386 = vmatpush2.msra.mxu0 0.0
    %387 = vmatprep.subr.mxu0 0.0
    %388 = vmatpush2.msra.mxu0 0.0
    %389 = vmatprep.subr.mxu0 0.0
    %390 = vmatpush2.msra.mxu0 0.0
    %391 = vmatprep.subr.mxu0 0.0
    %392 = vmatpush2.msra.mxu0 0.0
    %393 = vmatprep.subr.mxu0 0.0
    %394 = vmatpush2.msra.mxu0 0.0
    %395 = vmatprep.subr.mxu0 0.0
    %396 = vmatpush2.msra.mxu0 0.0
    %397 = vmatprep.mubr.f32.mxu0 0.0
    %398 = vmatmul.mubr.f32.gmra.mxu0 %v328
    %v399 = vpop.f32.mrf.mxu0
    %v400 = vadd.f32 %v325, %v399
    %v401 = vpop.f32.mrf.mxu0
    %402 = vmatprep.mubr.f32.mxu0 0.0
    %403 = vmatmul.mubr.f32.gmra.mxu0 %v331
    %v404 = vpop.f32.mrf.mxu0
    %v405 = vadd.f32 %v325, %v404
    %v406 = vpop.f32.mrf.mxu0
    %407 = vdwg.mxu0
    %408 = vst.msk [vmem:[#allocation16] sm:$0xff] %vm132, %v400
    %409 = vst.msk [vmem:[#allocation16 + $0x8] sm:$0xff] %vm132, %v405
    // Predicated region
    $region62: #{tpu_custom_call.1} parent=1 // pred_check
      _
    $region63: #{tpu_custom_call.1} parent=1 // pred_check_branch
      %411 = sbr.rel (0) target = $region65
    $region64: #{tpu_custom_call.1} parent=1 // pred_region
      %s413 = ssub.s32 256, 256
      %414 = vsyncadd [#allocation4], %s413
      %s415 = sshll.u32 [#allocation13], 4
      %s416 = int_to_ptr.vmem [resolvable:$true] %s415
      %421 = dma.vmem_to_hbm [thread:$0]  %s416, 256, %s9, [#allocation4], 128, 128, 8
    $region65: #{tpu_custom_call.1} parent=1 // pred_fallthru
      _
    // Predicated region
    $region66: #{tpu_custom_call.1} parent=1 // pred_check
      _
    $region67: #{tpu_custom_call.1} parent=1 // pred_check_branch
      %423 = sbr.rel (0) target = $region69
    $region68: #{tpu_custom_call.1} parent=1 // pred_region
      %s425 = ssub.s32 256, 256
      %426 = vsyncadd [#allocation15], %s425
      %s427 = sshll.u32 [#allocation14], 4
      %s428 = int_to_ptr.vmem [resolvable:$true] %s427
      %433 = dma.vmem_to_hbm [thread:$0]  %s428, 256, %s10, [#allocation15], 128, 128, 8
    $region69: #{tpu_custom_call.1} parent=1 // pred_fallthru
      _
    // Predicated region
    $region70: #{tpu_custom_call.1} parent=1 // pred_check
      _
    $region71: #{tpu_custom_call.1} parent=1 // pred_check_branch
      %435 = sbr.rel (0) target = $region73
    $region72: #{tpu_custom_call.1} parent=1 // pred_region
      %s437 = ssub.s32 256, 256
      %438 = vsyncadd [#allocation15], %s437
      %s439 = sshll.u32 [#allocation16], 4
      %s440 = int_to_ptr.vmem [resolvable:$true] %s439
      %445 = dma.vmem_to_hbm [thread:$0]  %s440, 256, %s11, [#allocation15], 128, 128, 8
    $region73: #{tpu_custom_call.1} parent=1 // pred_fallthru
      _
    // Predicated region
    $region74: #{tpu_custom_call.1} parent=1 // pred_check
      _
    $region75: #{tpu_custom_call.1} parent=1 // pred_check_branch
      %447 = sbr.rel (0) target = $region77
    $region76: #{tpu_custom_call.1} parent=1 // pred_region
      %448 = dma.done [#allocation4], 256
    $region77: #{tpu_custom_call.1} parent=1 // pred_fallthru
      _
    // Predicated region
    $region78: #{tpu_custom_call.1} parent=1 // pred_check
      _
    $region79: #{tpu_custom_call.1} parent=1 // pred_check_branch
      %450 = sbr.rel (0) target = $region81
    $region80: #{tpu_custom_call.1} parent=1 // pred_region
      %451 = dma.done [#allocation15], 256
    $region81: #{tpu_custom_call.1} parent=1 // pred_fallthru
      _
    // Predicated region
    $region82: #{tpu_custom_call.1} parent=1 // pred_check
      _
    $region83: #{tpu_custom_call.1} parent=1 // pred_check_branch
      %453 = sbr.rel (0) target = $region85
    $region84: #{tpu_custom_call.1} parent=1 // pred_region
      %454 = dma.done [#allocation15], 256
    $region85: #{tpu_custom_call.1} parent=1 // pred_fallthru
      _
    %455 = vsyncpa [#allocation3], 1
    %456 = vsyncpa [#allocation6], 1
    %457 = vsyncpa [#allocation9], 1
    %458 = vsyncpa [#allocation12], 1
    %459 = vsyncpa [#allocation4], 1
    %460 = vsyncpa [#allocation15], 1

</llo_original>
